<compile_context>
chip_gen: v7x
topology: tpu7x:2x2x1
jax: 0.10.0
libtpu: 0.0.40
codegen_flags: <defaults>
</compile_context>

<pallas_src>
import functools

import jax
import jax.numpy as jnp
from jax import lax
from jax.experimental import pallas as pl
from jax.experimental.pallas import tpu as pltpu

LANES = 128
SUBLANES = 8
CHUNK_ROWS = 64  # multiple of 32 -> sublane-aligned for f32 / bf16 / int8 packing


def _cdiv(a, b):
    return -(-a // b)


def _sublane_multiple(dtype):
    # Sub-32-bit dtypes pack along sublanes: bf16 needs 16-row, int8/fp8 32-row
    # alignment for the (rows, 128) block to lower without relayout.
    itemsize = jnp.dtype(dtype).itemsize
    return SUBLANES * max(1, 4 // max(1, itemsize))


def _num_tensorcores():
    # Only split the grid across TensorCores on chips that expose 2 TCs to one
    # program (v7x-class); v5e/v6e have a single TC so a split only adds
    # overflow-tile waste and extra branches.
    try:
        kind = (jax.devices()[0].device_kind or "").lower()
    except Exception:
        return 1
    return 2 if "v7" in kind else 1


def _gm_loss_kernel(x_ref, t_ref, out_ref, *, n, tiles_per_core, with_logits,
                    has_tail, chunk_rows):
    """Accumulates per-lane partial sums of p, t and t*p into out_ref.

    x_ref, t_ref : (block_rows, 128) input tiles (native dtype).
    out_ref      : (3, 8, 128) f32 accumulator block, resident across the
                   "arbitrary" grid axis (one block per core).
    """
    block_rows = x_ref.shape[0]
    num_chunks = block_rows // chunk_rows
    chunk_elems = chunk_rows * LANES
    tile_elems = block_rows * LANES
    k = chunk_rows // SUBLANES
    unroll = 2 if num_chunks >= 2 else 1

    c = pl.program_id(0)          # core (parallel) axis
    j = pl.program_id(1)          # tile (arbitrary / reduction) axis
    g = c * tiles_per_core + j    # global tile index (unclamped)

    @pl.when(j == 0)
    def _init():
        out_ref[...] = jnp.zeros_like(out_ref)

    def activation(x):
        if with_logits:
            # Single-EUP-op sigmoid: sigmoid(x) == 0.5 * (tanh(x/2) + 1).
            return 0.5 * jnp.tanh(0.5 * x) + 0.5
        return x

    def reduce_chunk(a):
        # (chunk_rows, 128) -> (8, 128) via pure VPU adds over sublane groups.
        return a.reshape(k, SUBLANES, LANES).sum(axis=0)

    def load_chunk(i):
        start = pl.multiple_of(i * chunk_rows, chunk_rows)
        x = x_ref[pl.ds(start, chunk_rows), :].astype(jnp.float32)
        t = t_ref[pl.ds(start, chunk_rows), :].astype(jnp.float32)
        return x, t

    zero = jnp.zeros((SUBLANES, LANES), jnp.float32)

    def run_loop(body_fn):
        acc_p, acc_t, acc_tp = lax.fori_loop(
            0, num_chunks, body_fn, (zero, zero, zero), unroll=unroll)
        out_ref[0] += acc_p
        out_ref[1] += acc_t
        out_ref[2] += acc_tp

    def dense_body(i, carry):
        acc_p, acc_t, acc_tp = carry
        x, t = load_chunk(i)
        p = activation(x)
        return (acc_p + reduce_chunk(p),
                acc_t + reduce_chunk(t),
                acc_tp + reduce_chunk(t * p))

    if not has_tail:
        # Every tile of every core is fully valid: no masking anywhere.
        run_loop(dense_body)
    else:
        tile_end = (g + 1) * tile_elems

        @pl.when(tile_end <= n)
        def _dense():
            run_loop(dense_body)

        @pl.when(tile_end > n)
        def _tail():
            # Cold path: at most one tile per core.  The iota is only
            # chunk-sized and hoisted out of the loop; the per-chunk validity
            # limit is a single scalar compare operand.
            row = lax.broadcasted_iota(jnp.int32, (chunk_rows, LANES), 0)
            col = lax.broadcasted_iota(jnp.int32, (chunk_rows, LANES), 1)
            local_idx = row * LANES + col
            base = n - g * tile_elems   # valid elements left from tile start

            def tail_body(i, carry):
                acc_p, acc_t, acc_tp = carry
                x, t = load_chunk(i)
                valid = local_idx < (base - i * chunk_elems)
                # Select (not multiply) so NaN/garbage from wrapper padding or
                # Pallas partial-block reads cannot leak through sigmoid.
                p = jnp.where(valid, activation(x), 0.0)
                t = jnp.where(valid, t, 0.0)
                return (acc_p + reduce_chunk(p),
                        acc_t + reduce_chunk(t),
                        acc_tp + reduce_chunk(t * p))

            run_loop(tail_body)


def gm_loss(inp, target, *, with_logits=True, smooth=1.0, block_rows=4096):
    """Pallas GM loss forward. `inp` / `target` may have any identical shape."""
    n = int(inp.size)
    flat_x = jnp.reshape(inp, (-1,))
    flat_t = jnp.reshape(target, (-1,))

    # Dtype-aware alignment: pad rows to 8/16/32 sublanes depending on packing.
    align = max(_sublane_multiple(flat_x.dtype), _sublane_multiple(flat_t.dtype))
    slab = align * LANES
    n_pad = _cdiv(n, slab) * slab
    if n_pad != n:
        flat_x = jnp.pad(flat_x, (0, n_pad - n))
        flat_t = jnp.pad(flat_t, (0, n_pad - n))

    rows = n_pad // LANES                       # multiple of `align`
    x2 = flat_x.reshape(rows, LANES)            # free reshape (contiguous)
    t2 = flat_t.reshape(rows, LANES)

    # Tile / chunk geometry (br is a multiple of chunk_rows, both sublane-aligned).
    chunk_rows = CHUNK_ROWS
    if rows <= chunk_rows:
        chunk_rows = rows
        br = rows
    else:
        br = min(int(block_rows), rows)
        br = max(chunk_rows, (br // chunk_rows) * chunk_rows)
    tile_elems = br * LANES

    num_tiles = _cdiv(rows, br)                 # real tiles covering the data
    nc = _num_tensorcores() if num_tiles >= 2 else 1
    tpc = _cdiv(num_tiles, nc)                  # tiles per core
    last_block = num_tiles - 1
    # Does any tile (ragged tail, wrapper pad, partial Pallas block, or an
    # overflow tile when num_tiles is odd and nc == 2) contain indices >= n?
    has_tail = (n != num_tiles * tile_elems) or (num_tiles != nc * tpc)

    if num_tiles == nc * tpc:
        def in_map(c, j):
            return (c * tpc + j, 0)
    else:
        # Overflow tiles re-read the last real block; their contribution is
        # zeroed by the in-kernel mask (their unclamped index range is >= n).
        def in_map(c, j):
            return (jnp.minimum(c * tpc + j, last_block), 0)

    kernel = functools.partial(
        _gm_loss_kernel,
        n=n,
        tiles_per_core=tpc,
        with_logits=bool(with_logits),
        has_tail=bool(has_tail),
        chunk_rows=chunk_rows,
    )

    def call(dim_semantics):
        return pl.pallas_call(
            kernel,
            out_shape=jax.ShapeDtypeStruct((nc * 3, SUBLANES, LANES),
                                           jnp.float32),
            grid_spec=pltpu.PrefetchScalarGridSpec(
                num_scalar_prefetch=0,
                grid=(nc, tpc),
                in_specs=[
                    pl.BlockSpec((br, LANES), in_map),
                    pl.BlockSpec((br, LANES), in_map),
                ],
                out_specs=pl.BlockSpec((3, SUBLANES, LANES),
                                       lambda c, j: (c, 0, 0)),
            ),
            compiler_params=pltpu.CompilerParams(
                dimension_semantics=dim_semantics,
                # Above the 16/32 MiB default scoped limits (v5e/v7x), well
                # under v7x's 64 MiB physical VMEM.
                vmem_limit_bytes=48 * 1024 * 1024),
        )(x2, t2)

    if nc == 2:
        # v7x: request an explicit TensorCore split of the leading grid axis;
        # fall back to plain "parallel" if the toolchain rejects CORE_PARALLEL.
        try:
            partials = call((pltpu.CORE_PARALLEL, pltpu.ARBITRARY))
        except Exception:
            # TODO(synk): confirm on v7x hardware that the chosen semantics
            # actually shard the nc axis across both TensorCores.
            partials = call(("parallel", "arbitrary"))
    else:
        partials = call(("arbitrary", "arbitrary"))

    # Tiny host-side (XLA) reduction of the per-core vector partials.
    sums = jnp.sum(partials, axis=(1, 2)).reshape(nc, 3).sum(axis=0)
    sum_p, sum_t, sum_tp = sums[0], sums[1], sums[2]

    # Confusion-matrix entries recovered algebraically:
    #   tp = sum(t*p), fp = sum((1-t)*p), fn = sum(t*(1-p)), tn = sum((1-t)(1-p))
    tp = sum_tp
    fp = sum_p - sum_tp
    fn = sum_t - sum_tp
    tn = jnp.float32(n) - sum_p - sum_t + sum_tp
    # TODO(synk): for n > 2^24 the f32 recombination above loses a few ULPs to
    # cancellation; redo this scalar algebra in f64 if x64 is enabled.

    smooth_f = jnp.float32(smooth)
    sens = tp / (tp + fn + smooth_f)
    spec = tn / (tn + fp + smooth_f)
    return 1.0 - jnp.sqrt(sens * spec)


def gm_loss_ref(inp, target, *, with_logits=True, smooth=1.0):
    """Pure-JAX reference mirroring the PyTorch module."""
    x = jnp.reshape(inp, (-1,)).astype(jnp.float32)
    t = jnp.reshape(target, (-1,)).astype(jnp.float32)
    p = jax.nn.sigmoid(x) if with_logits else x
    tp = jnp.sum(t * p)
    fp = jnp.sum((1.0 - t) * p)
    fn = jnp.sum(t * (1.0 - p))
    tn = jnp.sum((1.0 - t) * (1.0 - p))
    sens = tp / (tp + fn + smooth)
    spec = tn / (tn + fp + smooth)
    return 1.0 - jnp.sqrt(sens * spec)


if __name__ == "__main__":
    key = jax.random.PRNGKey(0)
    keys = jax.random.split(key, 8)

    def check(x, y, name):
        out = jax.block_until_ready(gm_loss(x, y, with_logits=True, smooth=1.0))
        ref = gm_loss_ref(x, y, with_logits=True, smooth=1.0)
        assert jnp.allclose(out, ref, rtol=1e-4, atol=1e-5), (name, out, ref)

    # Primary case: segmentation-style NCHW logits + binary target.
    x1 = jax.random.normal(keys[0], (2, 4, 16, 16), dtype=jnp.float32)
    y1 = (jax.random.uniform(keys[1], (2, 4, 16, 16)) > 0.5).astype(jnp.float32)
    check(x1, y1, "nchw")

    # Ragged case: n not a multiple of the pad slab -> in-kernel tail mask.
    x2 = jax.random.normal(keys[2], (3, 7, 11), dtype=jnp.float32)
    y2 = (jax.random.uniform(keys[3], (3, 7, 11)) > 0.5).astype(jnp.float32)
    check(x2, y2, "ragged")

    # Multi-tile case: several grid steps, chunked fori_loop, and a partial
    # last Pallas block (rows not a multiple of block_rows).
    x3 = jax.random.normal(keys[4], (2, 4, 132, 128), dtype=jnp.float32)
    y3 = (jax.random.uniform(keys[5], (2, 4, 132, 128)) > 0.5).astype(jnp.float32)
    check(x3, y3, "multitile")

    # bf16 logits: exercises dtype-aware (16-row) sublane alignment and
    # native-dtype streaming with in-kernel upcast.
    x4 = jax.random.normal(keys[6], (2, 4, 16, 16), dtype=jnp.bfloat16)
    y4 = (jax.random.uniform(keys[7], (2, 4, 16, 16)) > 0.5).astype(jnp.float32)
    check(x4, y4, "bf16")

    print("KERNEL_OK")
</pallas_src>

<mosaic_0001>
module attributes {stable_mosaic.version = 11 : i64} {
  func.func @_gm_loss_kernel(%arg0: i32, %arg1: i32, %arg2: memref<16x128xf32, #tpu.memory_space<vmem>>, %arg3: memref<16x128xf32, #tpu.memory_space<vmem>>, %arg4: memref<3x8x128xf32, #tpu.memory_space<vmem>>) attributes {dimension_semantics = [#tpu.dimension_semantics<arbitrary>, #tpu.dimension_semantics<arbitrary>], iteration_bounds = array<i64: 1, 1>, scalar_prefetch = 0 : i64, scratch_operands = 0 : i64, tpu.core_type = #tpu.core_type<tc>, window_params = [{transform_indices = @transform_0, window_bounds = array<i64: 16, 128>}, {transform_indices = @transform_1, window_bounds = array<i64: 16, 128>}, {transform_indices = @transform_2, window_bounds = array<i64: 3, 8, 128>}]} {
    %c0_i32 = arith.constant 0 : i32
    %0 = arith.cmpi eq, %arg1, %c0_i32 : i32
    %1 = arith.extui %0 : i1 to i32
    %c0_i32_0 = arith.constant 0 : i32
    %2 = arith.cmpi ne, %1, %c0_i32_0 : i32
    scf.if %2 {
      %cst_25 = arith.constant 0.000000e+00 : f32
      %45 = vector.broadcast %cst_25 : f32 to vector<3x8x128xf32>
      %c0_26 = arith.constant 0 : index
      %c0_27 = arith.constant 0 : index
      %c0_28 = arith.constant 0 : index
      %46 = vector.load %arg4[%c0_26, %c0_27, %c0_28] : memref<3x8x128xf32, #tpu.memory_space<vmem>>, vector<3x8x128xf32>
      tpu.vector_store %arg4[%c0_26, %c0_27, %c0_28], %45 {strides = array<i32>} : memref<3x8x128xf32, #tpu.memory_space<vmem>>, vector<3x8x128xf32>,
    } else {
    }
    %cst = arith.constant 0.000000e+00 : f32
    %3 = vector.broadcast %cst : f32 to vector<8x128xf32>
    %c0_i32_1 = arith.constant 0 : i32
    %c16_i32 = arith.constant 16 : i32
    %4 = arith.muli %c0_i32_1, %c16_i32 : i32
    %5 = tpu.assume_multiple %4, 16 : i32
    %6 = arith.index_cast %5 : i32 to index
    %c0 = arith.constant 0 : index
    %7 = vector.load %arg2[%6, %c0] : memref<16x128xf32, #tpu.memory_space<vmem>>, vector<16x128xf32>
    %8 = arith.index_cast %5 : i32 to index
    %c0_2 = arith.constant 0 : index
    %9 = vector.load %arg3[%8, %c0_2] : memref<16x128xf32, #tpu.memory_space<vmem>>, vector<16x128xf32>
    %cst_3 = arith.constant 5.000000e-01 : f32
    %10 = vector.broadcast %cst_3 : f32 to vector<16x128xf32>
    %11 = arith.mulf %10, %7 : vector<16x128xf32>
    %12 = math.tanh %11 : vector<16x128xf32>
    %cst_4 = arith.constant 5.000000e-01 : f32
    %13 = vector.broadcast %cst_4 : f32 to vector<16x128xf32>
    %14 = arith.mulf %13, %12 : vector<16x128xf32>
    %cst_5 = arith.constant 5.000000e-01 : f32
    %15 = vector.broadcast %cst_5 : f32 to vector<16x128xf32>
    %16 = arith.addf %14, %15 : vector<16x128xf32>
    %17 = vector.shape_cast %16 : vector<16x128xf32> to vector<2x8x128xf32>
    %cst_6 = arith.constant dense<0.000000e+00> : vector<8x128xf32>
    %18 = vector.multi_reduction <add>, %17, %cst_6 [0] : vector<2x8x128xf32> to vector<8x128xf32>
    %19 = arith.addf %3, %18 : vector<8x128xf32>
    %20 = vector.shape_cast %9 : vector<16x128xf32> to vector<2x8x128xf32>
    %cst_7 = arith.constant dense<0.000000e+00> : vector<8x128xf32>
    %21 = vector.multi_reduction <add>, %20, %cst_7 [0] : vector<2x8x128xf32> to vector<8x128xf32>
    %22 = arith.addf %3, %21 : vector<8x128xf32>
    %23 = arith.mulf %9, %16 : vector<16x128xf32>
    %24 = vector.shape_cast %23 : vector<16x128xf32> to vector<2x8x128xf32>
    %cst_8 = arith.constant dense<0.000000e+00> : vector<8x128xf32>
    %25 = vector.multi_reduction <add>, %24, %cst_8 [0] : vector<2x8x128xf32> to vector<8x128xf32>
    %26 = arith.addf %3, %25 : vector<8x128xf32>
    %c1_i32 = arith.constant 1 : i32
    %c0_9 = arith.constant 0 : index
    %c0_10 = arith.constant 0 : index
    %c0_11 = arith.constant 0 : index
    %27 = vector.load %arg4[%c0_9, %c0_10, %c0_11] : memref<3x8x128xf32, #tpu.memory_space<vmem>>, vector<1x8x128xf32>
    %28 = vector.shape_cast %27 : vector<1x8x128xf32> to vector<8x128xf32>
    %29 = arith.addf %28, %19 : vector<8x128xf32>
    %c0_12 = arith.constant 0 : index
    %c0_13 = arith.constant 0 : index
    %c0_14 = arith.constant 0 : index
    %30 = vector.load %arg4[%c0_12, %c0_13, %c0_14] : memref<3x8x128xf32, #tpu.memory_space<vmem>>, vector<1x8x128xf32>
    %31 = vector.shape_cast %30 : vector<1x8x128xf32> to vector<8x128xf32>
    %32 = vector.shape_cast %29 : vector<8x128xf32> to vector<1x8x128xf32>
    tpu.vector_store %arg4[%c0_12, %c0_13, %c0_14], %32 {strides = array<i32>} : memref<3x8x128xf32, #tpu.memory_space<vmem>>, vector<1x8x128xf32>,
    %c1 = arith.constant 1 : index
    %c0_15 = arith.constant 0 : index
    %c0_16 = arith.constant 0 : index
    %33 = vector.load %arg4[%c1, %c0_15, %c0_16] : memref<3x8x128xf32, #tpu.memory_space<vmem>>, vector<1x8x128xf32>
    %34 = vector.shape_cast %33 : vector<1x8x128xf32> to vector<8x128xf32>
    %35 = arith.addf %34, %22 : vector<8x128xf32>
    %c1_17 = arith.constant 1 : index
    %c0_18 = arith.constant 0 : index
    %c0_19 = arith.constant 0 : index
    %36 = vector.load %arg4[%c1_17, %c0_18, %c0_19] : memref<3x8x128xf32, #tpu.memory_space<vmem>>, vector<1x8x128xf32>
    %37 = vector.shape_cast %36 : vector<1x8x128xf32> to vector<8x128xf32>
    %38 = vector.shape_cast %35 : vector<8x128xf32> to vector<1x8x128xf32>
    tpu.vector_store %arg4[%c1_17, %c0_18, %c0_19], %38 {strides = array<i32>} : memref<3x8x128xf32, #tpu.memory_space<vmem>>, vector<1x8x128xf32>,
    %c2 = arith.constant 2 : index
    %c0_20 = arith.constant 0 : index
    %c0_21 = arith.constant 0 : index
    %39 = vector.load %arg4[%c2, %c0_20, %c0_21] : memref<3x8x128xf32, #tpu.memory_space<vmem>>, vector<1x8x128xf32>
    %40 = vector.shape_cast %39 : vector<1x8x128xf32> to vector<8x128xf32>
    %41 = arith.addf %40, %26 : vector<8x128xf32>
    %c2_22 = arith.constant 2 : index
    %c0_23 = arith.constant 0 : index
    %c0_24 = arith.constant 0 : index
    %42 = vector.load %arg4[%c2_22, %c0_23, %c0_24] : memref<3x8x128xf32, #tpu.memory_space<vmem>>, vector<1x8x128xf32>
    %43 = vector.shape_cast %42 : vector<1x8x128xf32> to vector<8x128xf32>
    %44 = vector.shape_cast %41 : vector<8x128xf32> to vector<1x8x128xf32>
    tpu.vector_store %arg4[%c2_22, %c0_23, %c0_24], %44 {strides = array<i32>} : memref<3x8x128xf32, #tpu.memory_space<vmem>>, vector<1x8x128xf32>,
    return
  }
  func.func @transform_0(%arg0: i32, %arg1: i32) -> (i32, i32) {
    %c1_i32 = arith.constant 1 : i32
    %0 = arith.muli %arg0, %c1_i32 : i32
    %1 = arith.addi %0, %arg1 : i32
    %c0_i32 = arith.constant 0 : i32
    %c0_i32_0 = arith.constant 0 : i32
    return %1, %c0_i32 : i32, i32
  }
  func.func @transform_1(%arg0: i32, %arg1: i32) -> (i32, i32) {
    %c1_i32 = arith.constant 1 : i32
    %0 = arith.muli %arg0, %c1_i32 : i32
    %1 = arith.addi %0, %arg1 : i32
    %c0_i32 = arith.constant 0 : i32
    %c0_i32_0 = arith.constant 0 : i32
    return %1, %c0_i32 : i32, i32
  }
  func.func @transform_2(%arg0: i32, %arg1: i32) -> (i32, i32, i32) {
    %c0_i32 = arith.constant 0 : i32
    %c0_i32_0 = arith.constant 0 : i32
    %c0_i32_1 = arith.constant 0 : i32
    return %arg0, %c0_i32, %c0_i32_0 : i32, i32, i32
  }
}

</mosaic_0001>

<llo_original>
// kernel: tpu_custom_call.1
$region0: #{tpu_custom_call.1}
  #allocation0 [shape = 'u32[]', space=smem, size = 0x4, offset = 0x4, fixed_abs, tag = 'smem constant byte address 0x4 - core index']
  #allocation1 [shape = 'u32[144,128]{1,0:T(1,128)}', space=vmem, size = 0x12000, scoped, tag = 'internal scratch']
  %s0 = inlined_call_operand.hbm [shape: f32[16,128], index: 0, kind: input, shape index: {}]
  %s1 = inlined_call_operand.hbm [shape: f32[16,128], index: 1, kind: input, shape index: {}]
  %s2 = inlined_call_operand.hbm [shape: f32[3,8,128], index: 2, kind: output, shape index: {}]
  %s3 = sld [smem:[#allocation0]]
  $region30: #{tpu_custom_call.1} parent=0
    _
  %s5 = ssub.s32 1, %s3
  %s6 = scalar_select 0, %s5, %s3
  $region1: #{tpu_custom_call.1} parent=0
    #allocation2 [shape = 'u8[8192]{0}', space=vmem, size = 0x2000, scoped, tag = 'input window, operand 0, single buffered']
    #allocation3 [shape = 's32[1]{0}', space=sflag, size = 0x4, scoped, tag = 'scoped memory for tpu_custom_call.1']
    #allocation4 [shape = 's32[1]{0}', space=sflag, size = 0x4, scoped, tag = 'scoped memory for tpu_custom_call.1']
    #allocation5 [shape = 'u8[8192]{0}', space=vmem, size = 0x2000, scoped, tag = 'input window, operand 1, single buffered']
    #allocation6 [shape = 's32[1]{0}', space=sflag, size = 0x4, scoped, tag = 'scoped memory for tpu_custom_call.1']
    #allocation7 [shape = 'u8[12288]{0}', space=vmem, size = 0x3000, scoped, tag = 'output window, operand 0, single buffered']
    %7 = vsyncpa [#allocation3], 0
    %8 = vsyncpa [#allocation6], 0
    %9 = vsyncpa [#allocation4], 0
    // Predicated region
    $region2: #{tpu_custom_call.1} parent=1 // pred_check
      _
    $region3: #{tpu_custom_call.1} parent=1 // pred_check_branch
      %11 = sbr.rel (0) target = $region5
    $region4: #{tpu_custom_call.1} parent=1 // pred_region
      %s12 = sadd.s32 0, 0
      %s13 = smul.u32 2, %s12
      %s15 = ssub.s32 256, 256
      %16 = vsyncadd [#allocation3], %s15
      %s17 = smul.addr %s13, 128
      %s18 = scalar_lea.hbm %s0, %s17
      %s19 = sshll.u32 [#allocation2], 4
      %s20 = int_to_ptr.vmem [resolvable:$true] %s19
      %25 = dma.hbm_to_vmem [thread:$0]  %s18, 256, %s20, [#allocation3], 128, 128, 8
    $region5: #{tpu_custom_call.1} parent=1 // pred_fallthru
      _
    // Predicated region
    $region6: #{tpu_custom_call.1} parent=1 // pred_check
      _
    $region7: #{tpu_custom_call.1} parent=1 // pred_check_branch
      %27 = sbr.rel (0) target = $region9
    $region8: #{tpu_custom_call.1} parent=1 // pred_region
      %s28 = sadd.s32 0, 0
      %s29 = smul.u32 2, %s28
      %s31 = ssub.s32 256, 256
      %32 = vsyncadd [#allocation6], %s31
      %s33 = smul.addr %s29, 128
      %s34 = scalar_lea.hbm %s1, %s33
      %s35 = sshll.u32 [#allocation5], 4
      %s36 = int_to_ptr.vmem [resolvable:$true] %s35
      %41 = dma.hbm_to_vmem [thread:$0]  %s34, 256, %s36, [#allocation6], 128, 128, 8
    $region9: #{tpu_custom_call.1} parent=1 // pred_fallthru
      _
    // Predicated region
    $region10: #{tpu_custom_call.1} parent=1 // pred_check
      _
    $region11: #{tpu_custom_call.1} parent=1 // pred_check_branch
      %43 = sbr.rel (0) target = $region13
    $region12: #{tpu_custom_call.1} parent=1 // pred_region
      %44 = dma.done [#allocation3], 256
    $region13: #{tpu_custom_call.1} parent=1 // pred_fallthru
      _
    // Predicated region
    $region14: #{tpu_custom_call.1} parent=1 // pred_check
      _
    $region15: #{tpu_custom_call.1} parent=1 // pred_check_branch
      %46 = sbr.rel (0) target = $region17
    $region16: #{tpu_custom_call.1} parent=1 // pred_region
      %47 = dma.done [#allocation6], 256
    $region17: #{tpu_custom_call.1} parent=1 // pred_fallthru
      _
    %s48 = sadd.s32 0, 0
    %s49 = smul.u32 2, %s48
    %s50 = sadd.s32 0, 0
    %s51 = smul.u32 2, %s50
    %p52 = scmp.eq.s32.totalorder 0, 0
    // Predicated region
    $region18: #{tpu_custom_call.1} parent=1 // pred_check
      %p53 = pneg %p52
    $region19: #{tpu_custom_call.1} parent=1 // pred_check_branch
      %55 = sbr.rel (%p53) target = $region21
    $region20: #{tpu_custom_call.1} parent=1 // pred_region
      %56 = vst [vmem:[#allocation7] sm:$0xff] 0.0
      %57 = vst [vmem:[#allocation7 + $0x8] sm:$0xff] 0.0
      %58 = vst [vmem:[#allocation7 + $0x10] sm:$0xff] 0.0
    $region21: #{tpu_custom_call.1} parent=1 // pred_fallthru
      _
    %v59 = vld [vmem:[#allocation2] sm:$0xff]
    %v60 = vld [vmem:[#allocation2 + $0x8] sm:$0xff]
    %v61 = vld [vmem:[#allocation5] sm:$0xff]
    %v62 = vld [vmem:[#allocation5 + $0x8] sm:$0xff]
    %v63 = vmul.f32 %v59, 0.5
    %v64 = vmul.f32 %v60, 0.5
    %v65 = vtanh.pop %v63
    %v66 = vtanh.pop %v64
    %v67 = vmul.f32 %v65, 0.5
    %v68 = vmul.f32 %v66, 0.5
    %v69 = vadd.f32 %v67, 0.5
    %v70 = vadd.f32 %v68, 0.5
    %v71 = vadd.f32 %v69, %v70
    %v72 = vadd.f32 %v71, 0.0
    %v73 = vadd.f32 %v61, %v62
    %v74 = vadd.f32 %v73, 0.0
    %v75 = vmul.f32 %v61, %v69
    %v76 = vmul.f32 %v62, %v70
    %v77 = vadd.f32 %v75, %v76
    %v78 = vadd.f32 %v77, 0.0
    %v79 = vld [vmem:[#allocation7] sm:$0xff]
    %v80 = vadd.f32 %v79, %v72
    %81 = vst [vmem:[#allocation7] sm:$0xff] %v80
    %s82 = scalar_lea.vmem [#allocation7], 8
    %v83 = vld [vmem:[%s82] sm:$0xff]
    %v84 = vadd.f32 %v83, %v74
    %85 = vst [vmem:[%s82] sm:$0xff] %v84
    %s86 = scalar_lea.vmem [#allocation7], 16
    %v87 = vld [vmem:[%s86] sm:$0xff]
    %v88 = vadd.f32 %v87, %v78
    %89 = vst [vmem:[%s86] sm:$0xff] %v88
    // Predicated region
    $region22: #{tpu_custom_call.1} parent=1 // pred_check
      _
    $region23: #{tpu_custom_call.1} parent=1 // pred_check_branch
      %91 = sbr.rel (0) target = $region25
    $region24: #{tpu_custom_call.1} parent=1 // pred_region
      %s93 = ssub.s32 384, 384
      %94 = vsyncadd [#allocation4], %s93
      %s95 = sshll.u32 [#allocation7], 4
      %s96 = int_to_ptr.vmem [resolvable:$true] %s95
      %101 = dma.vmem_to_hbm [thread:$0]  %s96, 384, %s2, [#allocation4], 128, 128, 8
    $region25: #{tpu_custom_call.1} parent=1 // pred_fallthru
      _
    // Predicated region
    $region26: #{tpu_custom_call.1} parent=1 // pred_check
      _
    $region27: #{tpu_custom_call.1} parent=1 // pred_check_branch
      %103 = sbr.rel (0) target = $region29
    $region28: #{tpu_custom_call.1} parent=1 // pred_region
      %104 = dma.done [#allocation4], 384
    $region29: #{tpu_custom_call.1} parent=1 // pred_fallthru
      _
    %105 = vsyncpa [#allocation3], 1
    %106 = vsyncpa [#allocation6], 1
    %107 = vsyncpa [#allocation4], 1

</llo_original>
